<compile_context>
chip_gen: v7x
topology: tpu7x:2x2x1
jax: 0.10.0
libtpu: 0.0.40
codegen_flags: <defaults>
</compile_context>

<pallas_src>
import jax
import jax.numpy as jnp
from jax.experimental import pallas as pl
from jax.experimental.pallas import tpu as pltpu

DIMS = 32          # hidden width ("dims"), divisible by 8 (GroupNorm groups)
GROUPS = 8
GRID_DIMS = 8      # embedding width (inert: multiplied by 0 in the forward)
NUM_GRID = 10      # len(grid_dict)
N_FEAT = 16        # x feature count (x_loc.shape[1])
RRELU_SLOPE = (1.0 / 8.0 + 1.0 / 3.0) / 2.0  # eval-mode RReLU negative slope
EPS = 1e-5


def _rrelu_eval(x):
    return jnp.where(x >= 0, x, x * RRELU_SLOPE)


def _make_group_maps(dims, groups):
    """One-hot channel->group map G (dims, groups) and its transpose, built
    with iota + compares only (no integer division, Mosaic-friendly)."""
    gs = dims // groups
    c = jax.lax.broadcasted_iota(jnp.int32, (dims, groups), 0)
    g = jax.lax.broadcasted_iota(jnp.int32, (dims, groups), 1)
    d = c - g * gs
    G = ((d >= 0) & (d < gs)).astype(jnp.float32)            # (dims, groups)
    gT = jax.lax.broadcasted_iota(jnp.int32, (groups, dims), 0)
    cT = jax.lax.broadcasted_iota(jnp.int32, (groups, dims), 1)
    dT = cT - gT * gs
    Gt = ((dT >= 0) & (dT < gs)).astype(jnp.float32)         # (groups, dims)
    return G, Gt


def _group_norm_affine(h, G, Gt_gamma, beta, inv_gs, eps):
    """GroupNorm + affine for a (TB, C) tile.

    Group mean / mean-of-squares use ONE stacked (2TB, C) @ (C, groups) MXU
    reduction; rsqrt is taken at group granularity; gamma is pre-folded into
    the expansion map so the epilogue is a single fused h*scale + shift.
    """
    tb = h.shape[0]
    red = jnp.dot(jnp.concatenate([h, h * h], axis=0), G,
                  preferred_element_type=jnp.float32) * inv_gs       # (2TB, groups)
    mean_g = red[:tb]
    var_g = jnp.maximum(red[tb:] - mean_g * mean_g, 0.0)             # clamp >= 0
    rstd_g = jax.lax.rsqrt(var_g + eps)                              # (TB, groups)
    exp = jnp.dot(jnp.concatenate([rstd_g, mean_g * rstd_g], axis=0), Gt_gamma,
                  preferred_element_type=jnp.float32)                # (2TB, C)
    # h*(gamma*rstd) + (beta - gamma*mean*rstd) == gamma*(h-mean)*rstd + beta
    return h * exp[:tb] + (beta - exp[tb:])


def path_kernel(x_ref, w1_ref, w2_ref, gn_ref, o_ref):
    dims = w1_ref.shape[1]
    groups = GROUPS
    inv_gs = float(groups) / float(dims)                   # 1 / (dims // groups)
    G, Gt = _make_group_maps(dims, groups)

    gn = gn_ref[...]                                       # (4, dims): g1, b1, g2, b2
    g1, b1 = gn[0:1], gn[1:2]
    g2, b2 = gn[2:3], gn[3:4]

    x = x_ref[...]
    # linear1 (no bias) -> GroupNorm(8, dims) -> RReLU(eval)
    h1 = jnp.dot(x, w1_ref[...], preferred_element_type=jnp.float32)
    h1 = _rrelu_eval(_group_norm_affine(h1, G, Gt * g1, b1, inv_gs, EPS))
    # linear2 (no bias) -> GroupNorm(8, dims) -> RReLU(eval)
    h2 = jnp.dot(h1, w2_ref[...], preferred_element_type=jnp.float32)
    h2 = _rrelu_eval(_group_norm_affine(h2, G, Gt * g2, b2, inv_gs, EPS))
    o_ref[...] = h2


def init_params(key):
    k = jax.random.split(key, 7)
    in_f = N_FEAT + GRID_DIMS
    return {
        # nn.Embedding(len(grid_dict), grid_dims)
        "embedding": jax.random.normal(k[0], (NUM_GRID, GRID_DIMS), jnp.float32),
        # nn.Linear(in_f, dims, bias=False) — stored transposed (in_f, dims)
        "w1": jax.random.normal(k[1], (in_f, DIMS), jnp.float32) * (1.0 / jnp.sqrt(in_f)),
        "gn1_w": 1.0 + 0.1 * jax.random.normal(k[2], (1, DIMS), jnp.float32),
        "gn1_b": 0.1 * jax.random.normal(k[3], (1, DIMS), jnp.float32),
        # nn.Linear(dims, dims, bias=False) — stored transposed (dims, dims)
        "w2": jax.random.normal(k[4], (DIMS, DIMS), jnp.float32) * (1.0 / jnp.sqrt(DIMS)),
        "gn2_w": 1.0 + 0.1 * jax.random.normal(k[5], (1, DIMS), jnp.float32),
        "gn2_b": 0.1 * jax.random.normal(k[6], (1, DIMS), jnp.float32),
    }


def path_forward(g_idx, x, params, tb=None):
    """Forward pass. `g_idx` is accepted for API fidelity but GridEmbedding(g)*0
    is mathematically inert, so the concat is skipped and only the first N_FEAT
    rows of W1 are used."""
    del g_idx  # embedding * 0 contributes nothing
    x = x.astype(jnp.float32)
    B, nf = x.shape
    dims = params["w1"].shape[1]

    # Large batch tile amortizes per-grid-step overhead; single grid step for
    # small B. tb is always a multiple of 8 (sublane alignment).
    if tb is None:
        tb = min(512, ((B + 7) // 8) * 8)
    Bp = ((B + tb - 1) // tb) * tb
    if Bp != B:
        x = jnp.pad(x, ((0, Bp - B), (0, 0)))

    # Use only the rows of W1 that multiply real features (zero-emb rows dropped).
    w1x = params["w1"][:nf]
    # Pack the four (1, dims) GroupNorm affine params into one (4, dims) input.
    gn_pack = jnp.concatenate(
        [params["gn1_w"], params["gn1_b"], params["gn2_w"], params["gn2_b"]], axis=0)

    out = pl.pallas_call(
        path_kernel,
        out_shape=jax.ShapeDtypeStruct((Bp, dims), jnp.float32),
        grid_spec=pltpu.PrefetchScalarGridSpec(
            num_scalar_prefetch=0,
            grid=(Bp // tb,),
            in_specs=[
                pl.BlockSpec((tb, nf), lambda i: (i, 0)),       # x tile
                pl.BlockSpec((nf, dims), lambda i: (0, 0)),     # W1 (real rows only)
                pl.BlockSpec((dims, dims), lambda i: (0, 0)),   # W2
                pl.BlockSpec((4, dims), lambda i: (0, 0)),      # packed GN params
            ],
            out_specs=pl.BlockSpec((tb, dims), lambda i: (i, 0)),
        ),
        compiler_params=pltpu.CompilerParams(
            dimension_semantics=("parallel",)),
    )(x, w1x, params["w2"], gn_pack)
    return out[:B]


def path_ref(g_idx, x, params):
    """Pure-JAX reference of the PyTorch eval forward."""
    emb = params["embedding"][g_idx] * 0.0
    xc = jnp.concatenate([x.astype(jnp.float32), emb], axis=1)

    def gn(h, w, b):
        N, C = h.shape
        hg = h.reshape(N, GROUPS, C // GROUPS)
        m = hg.mean(axis=2, keepdims=True)
        v = ((hg - m) ** 2).mean(axis=2, keepdims=True)
        hn = ((hg - m) / jnp.sqrt(v + EPS)).reshape(N, C)
        return hn * w + b

    h1 = _rrelu_eval(gn(xc @ params["w1"], params["gn1_w"], params["gn1_b"]))
    h2 = _rrelu_eval(gn(h1 @ params["w2"], params["gn2_w"], params["gn2_b"]))
    return h2


if __name__ == "__main__":
    key = jax.random.PRNGKey(0)
    kp, kg, kx = jax.random.split(key, 3)

    params = init_params(kp)

    B = 16
    g = jax.random.randint(kg, (B,), 0, NUM_GRID, dtype=jnp.int32)   # grid ids
    x = jax.random.normal(kx, (B, N_FEAT), jnp.float32)              # features

    out = path_forward(g, x, params)          # tb -> 16, grid=(1,) for the demo
    out = jax.block_until_ready(out)
    assert out.shape == (B, DIMS) and out.dtype == jnp.float32

    ref = jax.block_until_ready(path_ref(g, x, params))
    assert jnp.allclose(out, ref, rtol=1e-4, atol=1e-4), "mismatch vs reference"

    print("KERNEL_OK")
</pallas_src>

<mosaic_0001>
module attributes {stable_mosaic.version = 11 : i64} {
  func.func @path_kernel(%arg0: i32, %arg1: memref<16x16xf32, #tpu.memory_space<vmem>>, %arg2: memref<16x32xf32, #tpu.memory_space<vmem>>, %arg3: memref<32x32xf32, #tpu.memory_space<vmem>>, %arg4: memref<4x32xf32, #tpu.memory_space<vmem>>, %arg5: memref<16x32xf32, #tpu.memory_space<vmem>>) attributes {dimension_semantics = [#tpu.dimension_semantics<parallel>], iteration_bounds = array<i64: 1>, scalar_prefetch = 0 : i64, scratch_operands = 0 : i64, tpu.core_type = #tpu.core_type<tc>, window_params = [{transform_indices = @transform_0, window_bounds = array<i64: 16, 16>}, {pipeline_mode = #tpu.pipeline_mode<synchronous>, transform_indices = @transform_1, window_bounds = array<i64: 16, 32>}, {pipeline_mode = #tpu.pipeline_mode<synchronous>, transform_indices = @transform_2, window_bounds = array<i64: 32, 32>}, {pipeline_mode = #tpu.pipeline_mode<synchronous>, transform_indices = @transform_3, window_bounds = array<i64: 4, 32>}, {transform_indices = @transform_4, window_bounds = array<i64: 16, 32>}]} {
    %0 = tpu.iota {dimensions = array<i32: 0>} : vector<32x8xi32>
    %1 = tpu.iota {dimensions = array<i32: 1>} : vector<32x8xi32>
    %c4_i32 = arith.constant 4 : i32
    %2 = vector.broadcast %c4_i32 : i32 to vector<32x8xi32>
    %3 = arith.muli %1, %2 : vector<32x8xi32>
    %4 = arith.subi %0, %3 : vector<32x8xi32>
    %c0_i32 = arith.constant 0 : i32
    %5 = vector.broadcast %c0_i32 : i32 to vector<32x8xi32>
    %6 = arith.cmpi sge, %4, %5 : vector<32x8xi32>
    %c4_i32_0 = arith.constant 4 : i32
    %7 = vector.broadcast %c4_i32_0 : i32 to vector<32x8xi32>
    %8 = arith.cmpi slt, %4, %7 : vector<32x8xi32>
    %9 = arith.andi %6, %8 : vector<32x8xi1>
    %10 = arith.extui %9 : vector<32x8xi1> to vector<32x8xi32>
    %11 = arith.sitofp %10 : vector<32x8xi32> to vector<32x8xf32>
    %12 = tpu.iota {dimensions = array<i32: 0>} : vector<8x32xi32>
    %13 = tpu.iota {dimensions = array<i32: 1>} : vector<8x32xi32>
    %c4_i32_1 = arith.constant 4 : i32
    %14 = vector.broadcast %c4_i32_1 : i32 to vector<8x32xi32>
    %15 = arith.muli %12, %14 : vector<8x32xi32>
    %16 = arith.subi %13, %15 : vector<8x32xi32>
    %c0_i32_2 = arith.constant 0 : i32
    %17 = vector.broadcast %c0_i32_2 : i32 to vector<8x32xi32>
    %18 = arith.cmpi sge, %16, %17 : vector<8x32xi32>
    %c4_i32_3 = arith.constant 4 : i32
    %19 = vector.broadcast %c4_i32_3 : i32 to vector<8x32xi32>
    %20 = arith.cmpi slt, %16, %19 : vector<8x32xi32>
    %21 = arith.andi %18, %20 : vector<8x32xi1>
    %22 = arith.extui %21 : vector<8x32xi1> to vector<8x32xi32>
    %23 = arith.sitofp %22 : vector<8x32xi32> to vector<8x32xf32>
    %c0 = arith.constant 0 : index
    %c0_4 = arith.constant 0 : index
    %24 = vector.load %arg4[%c0, %c0_4] : memref<4x32xf32, #tpu.memory_space<vmem>>, vector<4x32xf32>
    %25 = vector.extract_strided_slice %24 {offsets = [0, 0], sizes = [1, 32], strides = [1, 1]} : vector<4x32xf32> to vector<1x32xf32>
    %26 = vector.extract_strided_slice %24 {offsets = [1, 0], sizes = [1, 32], strides = [1, 1]} : vector<4x32xf32> to vector<1x32xf32>
    %27 = vector.extract_strided_slice %24 {offsets = [2, 0], sizes = [1, 32], strides = [1, 1]} : vector<4x32xf32> to vector<1x32xf32>
    %28 = vector.extract_strided_slice %24 {offsets = [3, 0], sizes = [1, 32], strides = [1, 1]} : vector<4x32xf32> to vector<1x32xf32>
    %c0_5 = arith.constant 0 : index
    %c0_6 = arith.constant 0 : index
    %29 = vector.load %arg1[%c0_5, %c0_6] : memref<16x16xf32, #tpu.memory_space<vmem>>, vector<16x16xf32>
    %c0_7 = arith.constant 0 : index
    %c0_8 = arith.constant 0 : index
    %30 = vector.load %arg2[%c0_7, %c0_8] : memref<16x32xf32, #tpu.memory_space<vmem>>, vector<16x32xf32>
    %cst = arith.constant dense<0.000000e+00> : vector<16x32xf32>
    %31 = tpu.matmul %29, %30, %cst {dimension_numbers = #tpu.dot_dimension_numbers<[1], [0], [0], [1], [0, 0, 1, 1], [], []>} : vector<16x16xf32>, vector<16x32xf32>, vector<16x32xf32> -> vector<16x32xf32>
    %32 = vector.broadcast %25 : vector<1x32xf32> to vector<8x32xf32>
    %33 = arith.mulf %23, %32 : vector<8x32xf32>
    %34 = arith.mulf %31, %31 : vector<16x32xf32>
    %35 = tpu.concatenate %31, %34 in 0 : vector<16x32xf32>, vector<16x32xf32> -> vector<32x32xf32>
    %cst_9 = arith.constant dense<0.000000e+00> : vector<32x8xf32>
    %36 = tpu.matmul %35, %11, %cst_9 {dimension_numbers = #tpu.dot_dimension_numbers<[1], [0], [0], [1], [0, 0, 1, 1], [], []>} : vector<32x32xf32>, vector<32x8xf32>, vector<32x8xf32> -> vector<32x8xf32>
    %cst_10 = arith.constant 2.500000e-01 : f32
    %37 = vector.broadcast %cst_10 : f32 to vector<32x8xf32>
    %38 = arith.mulf %36, %37 : vector<32x8xf32>
    %39 = vector.extract_strided_slice %38 {offsets = [0, 0], sizes = [16, 8], strides = [1, 1]} : vector<32x8xf32> to vector<16x8xf32>
    %40 = vector.extract_strided_slice %38 {offsets = [16, 0], sizes = [16, 8], strides = [1, 1]} : vector<32x8xf32> to vector<16x8xf32>
    %41 = arith.mulf %39, %39 : vector<16x8xf32>
    %42 = arith.subf %40, %41 : vector<16x8xf32>
    %cst_11 = arith.constant 0.000000e+00 : f32
    %43 = vector.broadcast %cst_11 : f32 to vector<16x8xf32>
    %44 = arith.maximumf %42, %43 : vector<16x8xf32>
    %cst_12 = arith.constant 9.99999974E-6 : f32
    %45 = vector.broadcast %cst_12 : f32 to vector<16x8xf32>
    %46 = arith.addf %44, %45 : vector<16x8xf32>
    %47 = math.rsqrt %46 : vector<16x8xf32>
    %48 = arith.mulf %39, %47 : vector<16x8xf32>
    %49 = tpu.concatenate %47, %48 in 0 : vector<16x8xf32>, vector<16x8xf32> -> vector<32x8xf32>
    %cst_13 = arith.constant dense<0.000000e+00> : vector<32x32xf32>
    %50 = tpu.matmul %49, %33, %cst_13 {dimension_numbers = #tpu.dot_dimension_numbers<[1], [0], [0], [1], [0, 0, 1, 1], [], []>} : vector<32x8xf32>, vector<8x32xf32>, vector<32x32xf32> -> vector<32x32xf32>
    %51 = vector.extract_strided_slice %50 {offsets = [0, 0], sizes = [16, 32], strides = [1, 1]} : vector<32x32xf32> to vector<16x32xf32>
    %52 = arith.mulf %31, %51 : vector<16x32xf32>
    %53 = vector.extract_strided_slice %50 {offsets = [16, 0], sizes = [16, 32], strides = [1, 1]} : vector<32x32xf32> to vector<16x32xf32>
    %54 = vector.broadcast %26 : vector<1x32xf32> to vector<16x32xf32>
    %55 = arith.subf %54, %53 : vector<16x32xf32>
    %56 = arith.addf %52, %55 : vector<16x32xf32>
    %cst_14 = arith.constant 0.000000e+00 : f32
    %57 = vector.broadcast %cst_14 : f32 to vector<16x32xf32>
    %58 = arith.cmpf oge, %56, %57 : vector<16x32xf32>
    %cst_15 = arith.constant 0.229166672 : f32
    %59 = vector.broadcast %cst_15 : f32 to vector<16x32xf32>
    %60 = arith.mulf %56, %59 : vector<16x32xf32>
    %61 = arith.select %58, %56, %60 : vector<16x32xi1>, vector<16x32xf32>
    %c0_16 = arith.constant 0 : index
    %c0_17 = arith.constant 0 : index
    %62 = vector.load %arg3[%c0_16, %c0_17] : memref<32x32xf32, #tpu.memory_space<vmem>>, vector<32x32xf32>
    %cst_18 = arith.constant dense<0.000000e+00> : vector<16x32xf32>
    %63 = tpu.matmul %61, %62, %cst_18 {dimension_numbers = #tpu.dot_dimension_numbers<[1], [0], [0], [1], [0, 0, 1, 1], [], []>} : vector<16x32xf32>, vector<32x32xf32>, vector<16x32xf32> -> vector<16x32xf32>
    %64 = vector.broadcast %27 : vector<1x32xf32> to vector<8x32xf32>
    %65 = arith.mulf %23, %64 : vector<8x32xf32>
    %66 = arith.mulf %63, %63 : vector<16x32xf32>
    %67 = tpu.concatenate %63, %66 in 0 : vector<16x32xf32>, vector<16x32xf32> -> vector<32x32xf32>
    %cst_19 = arith.constant dense<0.000000e+00> : vector<32x8xf32>
    %68 = tpu.matmul %67, %11, %cst_19 {dimension_numbers = #tpu.dot_dimension_numbers<[1], [0], [0], [1], [0, 0, 1, 1], [], []>} : vector<32x32xf32>, vector<32x8xf32>, vector<32x8xf32> -> vector<32x8xf32>
    %cst_20 = arith.constant 2.500000e-01 : f32
    %69 = vector.broadcast %cst_20 : f32 to vector<32x8xf32>
    %70 = arith.mulf %68, %69 : vector<32x8xf32>
    %71 = vector.extract_strided_slice %70 {offsets = [0, 0], sizes = [16, 8], strides = [1, 1]} : vector<32x8xf32> to vector<16x8xf32>
    %72 = vector.extract_strided_slice %70 {offsets = [16, 0], sizes = [16, 8], strides = [1, 1]} : vector<32x8xf32> to vector<16x8xf32>
    %73 = arith.mulf %71, %71 : vector<16x8xf32>
    %74 = arith.subf %72, %73 : vector<16x8xf32>
    %cst_21 = arith.constant 0.000000e+00 : f32
    %75 = vector.broadcast %cst_21 : f32 to vector<16x8xf32>
    %76 = arith.maximumf %74, %75 : vector<16x8xf32>
    %cst_22 = arith.constant 9.99999974E-6 : f32
    %77 = vector.broadcast %cst_22 : f32 to vector<16x8xf32>
    %78 = arith.addf %76, %77 : vector<16x8xf32>
    %79 = math.rsqrt %78 : vector<16x8xf32>
    %80 = arith.mulf %71, %79 : vector<16x8xf32>
    %81 = tpu.concatenate %79, %80 in 0 : vector<16x8xf32>, vector<16x8xf32> -> vector<32x8xf32>
    %cst_23 = arith.constant dense<0.000000e+00> : vector<32x32xf32>
    %82 = tpu.matmul %81, %65, %cst_23 {dimension_numbers = #tpu.dot_dimension_numbers<[1], [0], [0], [1], [0, 0, 1, 1], [], []>} : vector<32x8xf32>, vector<8x32xf32>, vector<32x32xf32> -> vector<32x32xf32>
    %83 = vector.extract_strided_slice %82 {offsets = [0, 0], sizes = [16, 32], strides = [1, 1]} : vector<32x32xf32> to vector<16x32xf32>
    %84 = arith.mulf %63, %83 : vector<16x32xf32>
    %85 = vector.extract_strided_slice %82 {offsets = [16, 0], sizes = [16, 32], strides = [1, 1]} : vector<32x32xf32> to vector<16x32xf32>
    %86 = vector.broadcast %28 : vector<1x32xf32> to vector<16x32xf32>
    %87 = arith.subf %86, %85 : vector<16x32xf32>
    %88 = arith.addf %84, %87 : vector<16x32xf32>
    %cst_24 = arith.constant 0.000000e+00 : f32
    %89 = vector.broadcast %cst_24 : f32 to vector<16x32xf32>
    %90 = arith.cmpf oge, %88, %89 : vector<16x32xf32>
    %cst_25 = arith.constant 0.229166672 : f32
    %91 = vector.broadcast %cst_25 : f32 to vector<16x32xf32>
    %92 = arith.mulf %88, %91 : vector<16x32xf32>
    %93 = arith.select %90, %88, %92 : vector<16x32xi1>, vector<16x32xf32>
    %c0_26 = arith.constant 0 : index
    %c0_27 = arith.constant 0 : index
    %94 = vector.load %arg5[%c0_26, %c0_27] : memref<16x32xf32, #tpu.memory_space<vmem>>, vector<16x32xf32>
    tpu.vector_store %arg5[%c0_26, %c0_27], %93 {strides = array<i32>} : memref<16x32xf32, #tpu.memory_space<vmem>>, vector<16x32xf32>,
    return
  }
  func.func @transform_0(%arg0: i32) -> (i32, i32) {
    %c0_i32 = arith.constant 0 : i32
    %c0_i32_0 = arith.constant 0 : i32
    return %arg0, %c0_i32 : i32, i32
  }
  func.func @transform_1(%arg0: i32) -> (i32, i32) {
    %c0_i32 = arith.constant 0 : i32
    %c0_i32_0 = arith.constant 0 : i32
    %c0_i32_1 = arith.constant 0 : i32
    return %c0_i32, %c0_i32_0 : i32, i32
  }
  func.func @transform_2(%arg0: i32) -> (i32, i32) {
    %c0_i32 = arith.constant 0 : i32
    %c0_i32_0 = arith.constant 0 : i32
    %c0_i32_1 = arith.constant 0 : i32
    return %c0_i32, %c0_i32_0 : i32, i32
  }
  func.func @transform_3(%arg0: i32) -> (i32, i32) {
    %c0_i32 = arith.constant 0 : i32
    %c0_i32_0 = arith.constant 0 : i32
    %c0_i32_1 = arith.constant 0 : i32
    return %c0_i32, %c0_i32_0 : i32, i32
  }
  func.func @transform_4(%arg0: i32) -> (i32, i32) {
    %c0_i32 = arith.constant 0 : i32
    %c0_i32_0 = arith.constant 0 : i32
    return %arg0, %c0_i32 : i32, i32
  }
}

</mosaic_0001>

<llo_original>
// kernel: tpu_custom_call.1
$region0: #{tpu_custom_call.1}
  #allocation0 [shape = 'u32[]', space=smem, size = 0x4, offset = 0x4, fixed_abs, tag = 'smem constant byte address 0x4 - core index']
  #allocation1 [shape = 'u32[144,128]{1,0:T(1,128)}', space=vmem, size = 0x12000, scoped, tag = 'internal scratch']
  %s0 = inlined_call_operand.hbm [shape: f32[16,16], index: 0, kind: input, shape index: {}]
  %s1 = inlined_call_operand.hbm [shape: f32[16,32], index: 1, kind: input, shape index: {}]
  %s2 = inlined_call_operand.hbm [shape: f32[32,32], index: 2, kind: input, shape index: {}]
  %s3 = inlined_call_operand.vmem [shape: f32[4,32], index: 3, kind: input, shape index: {}]
  %s4 = inlined_call_operand.hbm [shape: f32[16,32], index: 4, kind: output, shape index: {}]
  %s5 = sld [smem:[#allocation0]]
  $region38: #{tpu_custom_call.1} parent=0
    _
  %s7 = ssub.s32 1, %s5
  %s8 = scalar_select 0, %s7, %s5
  $region1: #{tpu_custom_call.1} parent=0
    #allocation2 [shape = 'u8[8192]{0}', space=vmem, size = 0x2000, scoped, tag = 'input window, operand 0, single buffered']
    #allocation3 [shape = 's32[1]{0}', space=sflag, size = 0x4, scoped, tag = 'scoped memory for tpu_custom_call.1']
    #allocation4 [shape = 's32[1]{0}', space=sflag, size = 0x4, scoped, tag = 'scoped memory for tpu_custom_call.1']
    #allocation5 [shape = 'u8[8192]{0}', space=vmem, size = 0x2000, scoped, tag = 'input window, operand 1, single buffered']
    #allocation6 [shape = 's32[1]{0}', space=sflag, size = 0x4, scoped, tag = 'scoped memory for tpu_custom_call.1']
    #allocation7 [shape = 'u8[16384]{0}', space=vmem, size = 0x4000, scoped, tag = 'input window, operand 2, single buffered']
    #allocation8 [shape = 'u8[8192]{0}', space=vmem, size = 0x2000, scoped, tag = 'output window, operand 0, single buffered']
    %9 = vsyncpa [#allocation3], 0
    %10 = vsyncpa [#allocation6], 0
    %11 = vsyncpa [#allocation4], 0
    // Predicated region
    $region2: #{tpu_custom_call.1} parent=1 // pred_check
      _
    $region3: #{tpu_custom_call.1} parent=1 // pred_check_branch
      %13 = sbr.rel (0) target = $region5
    $region4: #{tpu_custom_call.1} parent=1 // pred_region
      %s15 = ssub.s32 256, 256
      %16 = vsyncadd [#allocation3], %s15
      %s17 = sshll.u32 [#allocation2], 4
      %s18 = int_to_ptr.vmem [resolvable:$true] %s17
      %23 = dma.hbm_to_vmem [thread:$0]  %s0, 256, %s18, [#allocation3], 128, 128, 8
    $region5: #{tpu_custom_call.1} parent=1 // pred_fallthru
      _
    // Predicated region
    $region6: #{tpu_custom_call.1} parent=1 // pred_check
      _
    $region7: #{tpu_custom_call.1} parent=1 // pred_check_branch
      %25 = sbr.rel (0) target = $region9
    $region8: #{tpu_custom_call.1} parent=1 // pred_region
      %s27 = ssub.s32 256, 256
      %28 = vsyncadd [#allocation6], %s27
      %s29 = sshll.u32 [#allocation5], 4
      %s30 = int_to_ptr.vmem [resolvable:$true] %s29
      %35 = dma.hbm_to_vmem [thread:$0]  %s1, 256, %s30, [#allocation6], 128, 128, 8
    $region9: #{tpu_custom_call.1} parent=1 // pred_fallthru
      _
    // Predicated region
    $region10: #{tpu_custom_call.1} parent=1 // pred_check
      _
    $region11: #{tpu_custom_call.1} parent=1 // pred_check_branch
      %37 = sbr.rel (0) target = $region13
    $region12: #{tpu_custom_call.1} parent=1 // pred_region
      %s39 = ssub.s32 512, 512
      %40 = vsyncadd [#allocation6], %s39
      %s41 = sshll.u32 [#allocation7], 4
      %s42 = int_to_ptr.vmem [resolvable:$true] %s41
      %47 = dma.hbm_to_vmem [thread:$0]  %s2, 512, %s42, [#allocation6], 128, 128, 8
    $region13: #{tpu_custom_call.1} parent=1 // pred_fallthru
      _
    // Predicated region
    $region14: #{tpu_custom_call.1} parent=1 // pred_check
      _
    $region15: #{tpu_custom_call.1} parent=1 // pred_check_branch
      %49 = sbr.rel (0) target = $region17
    $region16: #{tpu_custom_call.1} parent=1 // pred_region
      _
    $region17: #{tpu_custom_call.1} parent=1 // pred_fallthru
      _
    // Predicated region
    $region18: #{tpu_custom_call.1} parent=1 // pred_check
      _
    $region19: #{tpu_custom_call.1} parent=1 // pred_check_branch
      %51 = sbr.rel (0) target = $region21
    $region20: #{tpu_custom_call.1} parent=1 // pred_region
      %52 = dma.done [#allocation3], 256
    $region21: #{tpu_custom_call.1} parent=1 // pred_fallthru
      _
    // Predicated region
    $region22: #{tpu_custom_call.1} parent=1 // pred_check
      _
    $region23: #{tpu_custom_call.1} parent=1 // pred_check_branch
      %54 = sbr.rel (0) target = $region25
    $region24: #{tpu_custom_call.1} parent=1 // pred_region
      %55 = dma.done [#allocation6], 256
    $region25: #{tpu_custom_call.1} parent=1 // pred_fallthru
      _
    // Predicated region
    $region26: #{tpu_custom_call.1} parent=1 // pred_check
      _
    $region27: #{tpu_custom_call.1} parent=1 // pred_check_branch
      %57 = sbr.rel (0) target = $region29
    $region28: #{tpu_custom_call.1} parent=1 // pred_region
      %58 = dma.done [#allocation6], 512
    $region29: #{tpu_custom_call.1} parent=1 // pred_fallthru
      _
    %v59 = vlaneseq
    %v60 = vshrl.u32 %v59, 7
    %v61 = vadd.s32 %v60, 8
    %v62 = vadd.s32 %v60, 16
    %v63 = vadd.s32 %v60, 24
    %v64 = vlaneseq
    %v65 = vand.u32 %v64, 127
    %v66 = vmul.u32 %v65, 4
    %v67 = vsub.s32 %v60, %v66
    %v68 = vsub.s32 %v61, %v66
    %v69 = vsub.s32 %v62, %v66
    %v70 = vsub.s32 %v63, %v66
    %vm71 = vcmp.ge.s32.totalorder %v67, 0
    %vm72 = vcmp.ge.s32.totalorder %v68, 0
    %vm73 = vcmp.ge.s32.totalorder %v69, 0
    %vm74 = vcmp.ge.s32.totalorder %v70, 0
    %vm75 = vcmp.lt.s32.totalorder %v67, 4
    %vm76 = vcmp.lt.s32.totalorder %v68, 4
    %vm77 = vcmp.lt.s32.totalorder %v69, 4
    %vm78 = vcmp.lt.s32.totalorder %v70, 4
    %vm79 = vmand %vm71, %vm75
    %vm80 = vmand %vm72, %vm76
    %vm81 = vmand %vm73, %vm77
    %vm82 = vmand %vm74, %vm78
    %v83 = vsel %vm79, 1, 0
    %v84 = vsel %vm80, 1, 0
    %v85 = vsel %vm81, 1, 0
    %v86 = vsel %vm82, 1, 0
    %v87 = vcvt.s32.f32 %v83
    %v88 = vcvt.s32.f32 %v84
    %v89 = vcvt.s32.f32 %v85
    %v90 = vcvt.s32.f32 %v86
    %v91 = vmul.u32 %v60, 4
    %v92 = vsub.s32 %v65, %v91
    %vm93 = vcmp.ge.s32.totalorder %v92, 0
    %vm94 = vcmp.lt.s32.totalorder %v92, 4
    %vm95 = vmand %vm93, %vm94
    %v96 = vsel %vm95, 1, 0
    %v97 = vcvt.s32.f32 %v96
    %v98 = vld [vmem:[%s3] sm:$0xf]
    %v99 = vld [vmem:[#allocation2] sm:$0xff]
    %v100 = vld [vmem:[#allocation2 + $0x8] sm:$0xff]
    %v101 = vld [vmem:[#allocation5] sm:$0xff]
    %v102 = vld [vmem:[#allocation5 + $0x8] sm:$0xff]
    %vm103 = vcmask 130048
    %v105 = vsel %vm103, %v99, 0
    %v108 = vsel %vm103, %v100, 0
    %110 = vmatprep.subr.mxu0 0.0
    %111 = vmatpush1.msra.mxu0 %v101
    %112 = vmatprep.subr.mxu0 0.0
    %113 = vmatpush1.msra.mxu0 %v102
    %114 = vmatprep.subr.mxu0 0.0
    %115 = vmatpush1.msra.mxu0 0.0
    %116 = vmatprep.subr.mxu0 0.0
    %117 = vmatpush1.msra.mxu0 0.0
    %118 = vmatprep.subr.mxu0 0.0
    %119 = vmatpush1.msra.mxu0 0.0
    %120 = vmatprep.subr.mxu0 0.0
    %121 = vmatpush1.msra.mxu0 0.0
    %122 = vmatprep.subr.mxu0 0.0
    %123 = vmatpush1.msra.mxu0 0.0
    %124 = vmatprep.subr.mxu0 0.0
    %125 = vmatpush1.msra.mxu0 0.0
    %126 = vmatprep.subr.mxu0 0.0
    %127 = vmatpush1.msra.mxu0 0.0
    %128 = vmatprep.subr.mxu0 0.0
    %129 = vmatpush1.msra.mxu0 0.0
    %130 = vmatprep.subr.mxu0 0.0
    %131 = vmatpush1.msra.mxu0 0.0
    %132 = vmatprep.subr.mxu0 0.0
    %133 = vmatpush1.msra.mxu0 0.0
    %134 = vmatprep.subr.mxu0 0.0
    %135 = vmatpush1.msra.mxu0 0.0
    %136 = vmatprep.subr.mxu0 0.0
    %137 = vmatpush1.msra.mxu0 0.0
    %138 = vmatprep.subr.mxu0 0.0
    %139 = vmatpush1.msra.mxu0 0.0
    %140 = vmatprep.subr.mxu0 0.0
    %141 = vmatpush1.msra.mxu0 0.0
    %142 = vmatprep.subr.mxu0 0.0
    %143 = vmatpush1.msra.mxu0 0.0
    %144 = vmatprep.subr.mxu0 0.0
    %145 = vmatpush1.msra.mxu0 0.0
    %146 = vmatprep.subr.mxu0 0.0
    %147 = vmatpush1.msra.mxu0 0.0
    %148 = vmatprep.subr.mxu0 0.0
    %149 = vmatpush1.msra.mxu0 0.0
    %150 = vmatprep.subr.mxu0 0.0
    %151 = vmatpush1.msra.mxu0 0.0
    %152 = vmatprep.subr.mxu0 0.0
    %153 = vmatpush1.msra.mxu0 0.0
    %154 = vmatprep.subr.mxu0 0.0
    %155 = vmatpush1.msra.mxu0 0.0
    %156 = vmatprep.subr.mxu0 0.0
    %157 = vmatpush1.msra.mxu0 0.0
    %158 = vmatprep.subr.mxu0 0.0
    %159 = vmatpush1.msra.mxu0 0.0
    %160 = vmatprep.subr.mxu0 0.0
    %161 = vmatpush1.msra.mxu0 0.0
    %162 = vmatprep.subr.mxu0 0.0
    %163 = vmatpush1.msra.mxu0 0.0
    %164 = vmatprep.subr.mxu0 0.0
    %165 = vmatpush1.msra.mxu0 0.0
    %166 = vmatprep.subr.mxu0 0.0
    %167 = vmatpush1.msra.mxu0 0.0
    %168 = vmatprep.subr.mxu0 0.0
    %169 = vmatpush1.msra.mxu0 0.0
    %170 = vmatprep.subr.mxu0 0.0
    %171 = vmatpush1.msra.mxu0 0.0
    %172 = vmatprep.subr.mxu0 0.0
    %173 = vmatpush1.msra.mxu0 0.0
    %174 = vmatprep.mubr.f32.mxu0 0.0
    %175 = vmatmul.mubr.f32.gmra.mrb[0].mxu0 %v105
    %v176 = vpop.f32.mrb[0].mxu0
    %v177 = vadd.f32 0.0, %v176
    %v178 = vpop.f32.mrb[0].mxu0
    %179 = vmatprep.mubr.f32.mxu0 0.0
    %180 = vmatmul.mubr.f32.gmra.mrb[0].mxu0 %v108
    %v181 = vpop.f32.mrb[0].mxu0
    %v182 = vadd.f32 0.0, %v181
    %v183 = vpop.f32.mrb[0].mxu0
    %184 = vdwg.mxu0
    %v185 = vlaneseq
    %v186 = vshrl.u32 %v185, 7
    %v187 = vsub.s32 0, %v186
    %v188 = vrot.slane %v98, %v187
    %v189 = vmul.f32 %v97, %v188
    %v190 = vmul.f32 %v177, %v177
    %v191 = vmul.f32 %v182, %v182
    %vm192 = vcmask 261120
    %v194 = vsel %vm192, %v177, 0
    %v197 = vsel %vm192, %v182, 0
    %v200 = vsel %vm192, %v190, 0
    %v203 = vsel %vm192, %v191, 0
    %205 = vmatprep.subr.mxu0 0.0
    %206 = vmatpush1.msra.mxu0 %v87
    %207 = vmatprep.subr.mxu0 0.0
    %208 = vmatpush1.msra.mxu0 %v88
    %209 = vmatprep.subr.mxu0 0.0
    %210 = vmatpush1.msra.mxu0 %v89
    %211 = vmatprep.subr.mxu0 0.0
    %212 = vmatpush1.msra.mxu0 %v90
    %213 = vmatprep.subr.mxu0 0.0
    %214 = vmatpush1.msra.mxu0 0.0
    %215 = vmatprep.subr.mxu0 0.0
    %216 = vmatpush1.msra.mxu0 0.0
    %217 = vmatprep.subr.mxu0 0.0
    %218 = vmatpush1.msra.mxu0 0.0
    %219 = vmatprep.subr.mxu0 0.0
    %220 = vmatpush1.msra.mxu0 0.0
    %221 = vmatprep.subr.mxu0 0.0
    %222 = vmatpush1.msra.mxu0 0.0
    %223 = vmatprep.subr.mxu0 0.0
    %224 = vmatpush1.msra.mxu0 0.0
    %225 = vmatprep.subr.mxu0 0.0
    %226 = vmatpush1.msra.mxu0 0.0
    %227 = vmatprep.subr.mxu0 0.0
    %228 = vmatpush1.msra.mxu0 0.0
    %229 = vmatprep.subr.mxu0 0.0
    %230 = vmatpush1.msra.mxu0 0.0
    %231 = vmatprep.subr.mxu0 0.0
    %232 = vmatpush1.msra.mxu0 0.0
    %233 = vmatprep.subr.mxu0 0.0
    %234 = vmatpush1.msra.mxu0 0.0
    %235 = vmatprep.subr.mxu0 0.0
    %236 = vmatpush1.msra.mxu0 0.0
    %237 = vmatprep.subr.mxu0 0.0
    %238 = vmatpush1.msra.mxu0 0.0
    %239 = vmatprep.subr.mxu0 0.0
    %240 = vmatpush1.msra.mxu0 0.0
    %241 = vmatprep.subr.mxu0 0.0
    %242 = vmatpush1.msra.mxu0 0.0
    %243 = vmatprep.subr.mxu0 0.0
    %244 = vmatpush1.msra.mxu0 0.0
    %245 = vmatprep.subr.mxu0 0.0
    %246 = vmatpush1.msra.mxu0 0.0
    %247 = vmatprep.subr.mxu0 0.0
    %248 = vmatpush1.msra.mxu0 0.0
    %249 = vmatprep.subr.mxu0 0.0
    %250 = vmatpush1.msra.mxu0 0.0
    %251 = vmatprep.subr.mxu0 0.0
    %252 = vmatpush1.msra.mxu0 0.0
    %253 = vmatprep.subr.mxu0 0.0
    %254 = vmatpush1.msra.mxu0 0.0
    %255 = vmatprep.subr.mxu0 0.0
    %256 = vmatpush1.msra.mxu0 0.0
    %257 = vmatprep.subr.mxu0 0.0
    %258 = vmatpush1.msra.mxu0 0.0
    %259 = vmatprep.subr.mxu0 0.0
    %260 = vmatpush1.msra.mxu0 0.0
    %261 = vmatprep.subr.mxu0 0.0
    %262 = vmatpush1.msra.mxu0 0.0
    %263 = vmatprep.subr.mxu0 0.0
    %264 = vmatpush1.msra.mxu0 0.0
    %265 = vmatprep.subr.mxu0 0.0
    %266 = vmatpush1.msra.mxu0 0.0
    %267 = vmatprep.subr.mxu0 0.0
    %268 = vmatpush1.msra.mxu0 0.0
    %269 = vmatprep.mubr.f32.mxu0 0.0
    %270 = vmatmul.mubr.f32.gmra.mrb[0].mxu0 %v194
    %v271 = vpop.f32.mrb[0].mxu0
    %v272 = vadd.f32 0.0, %v271
    %v273 = vpop.f32.mrb[0].mxu0
    %274 = vmatprep.mubr.f32.mxu0 0.0
    %275 = vmatmul.mubr.f32.gmra.mrb[0].mxu0 %v197
    %v276 = vpop.f32.mrb[0].mxu0
    %v277 = vadd.f32 0.0, %v276
    %v278 = vpop.f32.mrb[0].mxu0
    %279 = vmatprep.mubr.f32.mxu0 0.0
    %280 = vmatmul.mubr.f32.gmra.mrb[0].mxu0 %v200
    %v281 = vpop.f32.mrb[0].mxu0
    %v282 = vadd.f32 0.0, %v281
    %v283 = vpop.f32.mrb[0].mxu0
    %284 = vmatprep.mubr.f32.mxu0 0.0
    %285 = vmatmul.mubr.f32.gmra.mrb[0].mxu0 %v203
    %v286 = vpop.f32.mrb[0].mxu0
    %v287 = vadd.f32 0.0, %v286
    %v288 = vpop.f32.mrb[0].mxu0
    %289 = vdwg.mxu0
    %v290 = vmul.f32 %v272, 0.25
    %v291 = vmul.f32 %v277, 0.25
    %v292 = vmul.f32 %v282, 0.25
    %v293 = vmul.f32 %v287, 0.25
    %v294 = vmul.f32 %v290, %v290
    %v295 = vmul.f32 %v291, %v291
    %v296 = vsub.f32 %v292, %v294
    %v297 = vsub.f32 %v293, %v295
    %v298 = vmax.f32 %v296, 0.0
    %v299 = vmax.f32 %v297, 0.0
    %v300 = vadd.f32 %v298, 1e-05
    %v301 = vadd.f32 %v299, 1e-05
    %v302 = vrsqrt.pop %v300
    %v303 = vrsqrt.pop %v301
    %v304 = vmul.f32 %v290, %v302
    %v305 = vmul.f32 %v291, %v303
    %vm306 = vcmask 64512
    %v308 = vsel %vm306, %v302, 0
    %v311 = vsel %vm306, %v303, 0
    %v314 = vsel %vm306, %v304, 0
    %v317 = vsel %vm306, %v305, 0
    %319 = vmatprep.subr.mxu0 0.0
    %320 = vmatpush1.msra.mxu0 %v189
    %321 = vmatprep.subr.mxu0 0.0
    %322 = vmatpush1.msra.mxu0 0.0
    %323 = vmatprep.subr.mxu0 0.0
    %324 = vmatpush1.msra.mxu0 0.0
    %325 = vmatprep.subr.mxu0 0.0
    %326 = vmatpush1.msra.mxu0 0.0
    %327 = vmatprep.subr.mxu0 0.0
    %328 = vmatpush1.msra.mxu0 0.0
    %329 = vmatprep.subr.mxu0 0.0
    %330 = vmatpush1.msra.mxu0 0.0
    %331 = vmatprep.subr.mxu0 0.0
    %332 = vmatpush1.msra.mxu0 0.0
    %333 = vmatprep.subr.mxu0 0.0
    %334 = vmatpush1.msra.mxu0 0.0
    %335 = vmatprep.subr.mxu0 0.0
    %336 = vmatpush1.msra.mxu0 0.0
    %337 = vmatprep.subr.mxu0 0.0
    %338 = vmatpush1.msra.mxu0 0.0
    %339 = vmatprep.subr.mxu0 0.0
    %340 = vmatpush1.msra.mxu0 0.0
    %341 = vmatprep.subr.mxu0 0.0
    %342 = vmatpush1.msra.mxu0 0.0
    %343 = vmatprep.subr.mxu0 0.0
    %344 = vmatpush1.msra.mxu0 0.0
    %345 = vmatprep.subr.mxu0 0.0
    %346 = vmatpush1.msra.mxu0 0.0
    %347 = vmatprep.subr.mxu0 0.0
    %348 = vmatpush1.msra.mxu0 0.0
    %349 = vmatprep.subr.mxu0 0.0
    %350 = vmatpush1.msra.mxu0 0.0
    %351 = vmatprep.subr.mxu0 0.0
    %352 = vmatpush1.msra.mxu0 0.0
    %353 = vmatprep.subr.mxu0 0.0
    %354 = vmatpush1.msra.mxu0 0.0
    %355 = vmatprep.subr.mxu0 0.0
    %356 = vmatpush1.msra.mxu0 0.0
    %357 = vmatprep.subr.mxu0 0.0
    %358 = vmatpush1.msra.mxu0 0.0
    %359 = vmatprep.subr.mxu0 0.0
    %360 = vmatpush1.msra.mxu0 0.0
    %361 = vmatprep.subr.mxu0 0.0
    %362 = vmatpush1.msra.mxu0 0.0
    %363 = vmatprep.subr.mxu0 0.0
    %364 = vmatpush1.msra.mxu0 0.0
    %365 = vmatprep.subr.mxu0 0.0
    %366 = vmatpush1.msra.mxu0 0.0
    %367 = vmatprep.subr.mxu0 0.0
    %368 = vmatpush1.msra.mxu0 0.0
    %369 = vmatprep.subr.mxu0 0.0
    %370 = vmatpush1.msra.mxu0 0.0
    %371 = vmatprep.subr.mxu0 0.0
    %372 = vmatpush1.msra.mxu0 0.0
    %373 = vmatprep.subr.mxu0 0.0
    %374 = vmatpush1.msra.mxu0 0.0
    %375 = vmatprep.subr.mxu0 0.0
    %376 = vmatpush1.msra.mxu0 0.0
    %377 = vmatprep.subr.mxu0 0.0
    %378 = vmatpush1.msra.mxu0 0.0
    %379 = vmatprep.subr.mxu0 0.0
    %380 = vmatpush1.msra.mxu0 0.0
    %381 = vmatprep.subr.mxu0 0.0
    %382 = vmatpush1.msra.mxu0 0.0
    %383 = vmatprep.mubr.f32.mxu0 0.0
    %384 = vmatmul.mubr.f32.gmra.mrb[0].mxu0 %v308
    %v385 = vpop.f32.mrb[0].mxu0
    %v386 = vadd.f32 0.0, %v385
    %v387 = vpop.f32.mrb[0].mxu0
    %388 = vmatprep.mubr.f32.mxu0 0.0
    %389 = vmatmul.mubr.f32.gmra.mrb[0].mxu0 %v311
    %v390 = vpop.f32.mrb[0].mxu0
    %v391 = vadd.f32 0.0, %v390
    %v392 = vpop.f32.mrb[0].mxu0
    %393 = vmatprep.mubr.f32.mxu0 0.0
    %394 = vmatmul.mubr.f32.gmra.mrb[0].mxu0 %v314
    %v395 = vpop.f32.mrb[0].mxu0
    %v396 = vadd.f32 0.0, %v395
    %v397 = vpop.f32.mrb[0].mxu0
    %398 = vmatprep.mubr.f32.mxu0 0.0
    %399 = vmatmul.mubr.f32.gmra.mrb[0].mxu0 %v317
    %v400 = vpop.f32.mrb[0].mxu0
    %v401 = vadd.f32 0.0, %v400
    %v402 = vpop.f32.mrb[0].mxu0
    %403 = vdwg.mxu0
    %v404 = vmul.f32 %v177, %v386
    %v405 = vmul.f32 %v182, %v391
    %v406 = vlaneseq
    %v407 = vshrl.u32 %v406, 7
    %v408 = vsub.s32 1, %v407
    %v409 = vrot.slane %v98, %v408
    %v410 = vsub.f32 %v409, %v396
    %v411 = vsub.f32 %v409, %v401
    %v412 = vadd.f32 %v404, %v410
    %v413 = vadd.f32 %v405, %v411
    %vm414 = vcmp.ge.f32.partialorder %v412, 0.0
    %vm415 = vcmp.ge.f32.partialorder %v413, 0.0
    %v416 = vmul.f32 %v412, 0.22916667
    %v417 = vmul.f32 %v413, 0.22916667
    %v418 = vsel %vm414, %v412, %v416
    %v419 = vsel %vm415, %v413, %v417
    %v420 = vld [vmem:[#allocation7] sm:$0xff]
    %v421 = vld [vmem:[#allocation7 + $0x8] sm:$0xff]
    %v422 = vld [vmem:[#allocation7 + $0x10] sm:$0xff]
    %v423 = vld [vmem:[#allocation7 + $0x18] sm:$0xff]
    %v425 = vsel %vm192, %v418, 0
    %v428 = vsel %vm192, %v419, 0
    %430 = vmatprep.subr.mxu0 0.0
    %431 = vmatpush1.msra.mxu0 %v420
    %432 = vmatprep.subr.mxu0 0.0
    %433 = vmatpush1.msra.mxu0 %v421
    %434 = vmatprep.subr.mxu0 0.0
    %435 = vmatpush1.msra.mxu0 %v422
    %436 = vmatprep.subr.mxu0 0.0
    %437 = vmatpush1.msra.mxu0 %v423
    %438 = vmatprep.subr.mxu0 0.0
    %439 = vmatpush1.msra.mxu0 0.0
    %440 = vmatprep.subr.mxu0 0.0
    %441 = vmatpush1.msra.mxu0 0.0
    %442 = vmatprep.subr.mxu0 0.0
    %443 = vmatpush1.msra.mxu0 0.0
    %444 = vmatprep.subr.mxu0 0.0
    %445 = vmatpush1.msra.mxu0 0.0
    %446 = vmatprep.subr.mxu0 0.0
    %447 = vmatpush1.msra.mxu0 0.0
    %448 = vmatprep.subr.mxu0 0.0
    %449 = vmatpush1.msra.mxu0 0.0
    %450 = vmatprep.subr.mxu0 0.0
    %451 = vmatpush1.msra.mxu0 0.0
    %452 = vmatprep.subr.mxu0 0.0
    %453 = vmatpush1.msra.mxu0 0.0
    %454 = vmatprep.subr.mxu0 0.0
    %455 = vmatpush1.msra.mxu0 0.0
    %456 = vmatprep.subr.mxu0 0.0
    %457 = vmatpush1.msra.mxu0 0.0
    %458 = vmatprep.subr.mxu0 0.0
    %459 = vmatpush1.msra.mxu0 0.0
    %460 = vmatprep.subr.mxu0 0.0
    %461 = vmatpush1.msra.mxu0 0.0
    %462 = vmatprep.subr.mxu0 0.0
    %463 = vmatpush1.msra.mxu0 0.0
    %464 = vmatprep.subr.mxu0 0.0
    %465 = vmatpush1.msra.mxu0 0.0
    %466 = vmatprep.subr.mxu0 0.0
    %467 = vmatpush1.msra.mxu0 0.0
    %468 = vmatprep.subr.mxu0 0.0
    %469 = vmatpush1.msra.mxu0 0.0
    %470 = vmatprep.subr.mxu0 0.0
    %471 = vmatpush1.msra.mxu0 0.0
    %472 = vmatprep.subr.mxu0 0.0
    %473 = vmatpush1.msra.mxu0 0.0
    %474 = vmatprep.subr.mxu0 0.0
    %475 = vmatpush1.msra.mxu0 0.0
    %476 = vmatprep.subr.mxu0 0.0
    %477 = vmatpush1.msra.mxu0 0.0
    %478 = vmatprep.subr.mxu0 0.0
    %479 = vmatpush1.msra.mxu0 0.0
    %480 = vmatprep.subr.mxu0 0.0
    %481 = vmatpush1.msra.mxu0 0.0
    %482 = vmatprep.subr.mxu0 0.0
    %483 = vmatpush1.msra.mxu0 0.0
    %484 = vmatprep.subr.mxu0 0.0
    %485 = vmatpush1.msra.mxu0 0.0
    %486 = vmatprep.subr.mxu0 0.0
    %487 = vmatpush1.msra.mxu0 0.0
    %488 = vmatprep.subr.mxu0 0.0
    %489 = vmatpush1.msra.mxu0 0.0
    %490 = vmatprep.subr.mxu0 0.0
    %491 = vmatpush1.msra.mxu0 0.0
    %492 = vmatprep.subr.mxu0 0.0
    %493 = vmatpush1.msra.mxu0 0.0
    %494 = vmatprep.mubr.f32.mxu0 0.0
    %495 = vmatmul.mubr.f32.gmra.mrb[0].mxu0 %v425
    %v496 = vpop.f32.mrb[0].mxu0
    %v497 = vadd.f32 0.0, %v496
    %v498 = vpop.f32.mrb[0].mxu0
    %499 = vmatprep.mubr.f32.mxu0 0.0
    %500 = vmatmul.mubr.f32.gmra.mrb[0].mxu0 %v428
    %v501 = vpop.f32.mrb[0].mxu0
    %v502 = vadd.f32 0.0, %v501
    %v503 = vpop.f32.mrb[0].mxu0
    %504 = vdwg.mxu0
    %v505 = vlaneseq
    %v506 = vshrl.u32 %v505, 7
    %v507 = vsub.s32 2, %v506
    %v508 = vrot.slane %v98, %v507
    %v509 = vmul.f32 %v97, %v508
    %v510 = vmul.f32 %v497, %v497
    %v511 = vmul.f32 %v502, %v502
    %v513 = vsel %vm192, %v497, 0
    %v516 = vsel %vm192, %v502, 0
    %v519 = vsel %vm192, %v510, 0
    %v522 = vsel %vm192, %v511, 0
    %524 = vmatprep.subr.mxu0 0.0
    %525 = vmatpush1.msra.mxu0 %v87
    %526 = vmatprep.subr.mxu0 0.0
    %527 = vmatpush1.msra.mxu0 %v88
    %528 = vmatprep.subr.mxu0 0.0
    %529 = vmatpush1.msra.mxu0 %v89
    %530 = vmatprep.subr.mxu0 0.0
    %531 = vmatpush1.msra.mxu0 %v90
    %532 = vmatprep.subr.mxu0 0.0
    %533 = vmatpush1.msra.mxu0 0.0
    %534 = vmatprep.subr.mxu0 0.0
    %535 = vmatpush1.msra.mxu0 0.0
    %536 = vmatprep.subr.mxu0 0.0
    %537 = vmatpush1.msra.mxu0 0.0
    %538 = vmatprep.subr.mxu0 0.0
    %539 = vmatpush1.msra.mxu0 0.0
    %540 = vmatprep.subr.mxu0 0.0
    %541 = vmatpush1.msra.mxu0 0.0
    %542 = vmatprep.subr.mxu0 0.0
    %543 = vmatpush1.msra.mxu0 0.0
    %544 = vmatprep.subr.mxu0 0.0
    %545 = vmatpush1.msra.mxu0 0.0
    %546 = vmatprep.subr.mxu0 0.0
    %547 = vmatpush1.msra.mxu0 0.0
    %548 = vmatprep.subr.mxu0 0.0
    %549 = vmatpush1.msra.mxu0 0.0
    %550 = vmatprep.subr.mxu0 0.0
    %551 = vmatpush1.msra.mxu0 0.0
    %552 = vmatprep.subr.mxu0 0.0
    %553 = vmatpush1.msra.mxu0 0.0
    %554 = vmatprep.subr.mxu0 0.0
    %555 = vmatpush1.msra.mxu0 0.0
    %556 = vmatprep.subr.mxu0 0.0
    %557 = vmatpush1.msra.mxu0 0.0
    %558 = vmatprep.subr.mxu0 0.0
    %559 = vmatpush1.msra.mxu0 0.0
    %560 = vmatprep.subr.mxu0 0.0
    %561 = vmatpush1.msra.mxu0 0.0
    %562 = vmatprep.subr.mxu0 0.0
    %563 = vmatpush1.msra.mxu0 0.0
    %564 = vmatprep.subr.mxu0 0.0
    %565 = vmatpush1.msra.mxu0 0.0
    %566 = vmatprep.subr.mxu0 0.0
    %567 = vmatpush1.msra.mxu0 0.0
    %568 = vmatprep.subr.mxu0 0.0
    %569 = vmatpush1.msra.mxu0 0.0
    %570 = vmatprep.subr.mxu0 0.0
    %571 = vmatpush1.msra.mxu0 0.0
    %572 = vmatprep.subr.mxu0 0.0
    %573 = vmatpush1.msra.mxu0 0.0
    %574 = vmatprep.subr.mxu0 0.0
    %575 = vmatpush1.msra.mxu0 0.0
    %576 = vmatprep.subr.mxu0 0.0
    %577 = vmatpush1.msra.mxu0 0.0
    %578 = vmatprep.subr.mxu0 0.0
    %579 = vmatpush1.msra.mxu0 0.0
    %580 = vmatprep.subr.mxu0 0.0
    %581 = vmatpush1.msra.mxu0 0.0
    %582 = vmatprep.subr.mxu0 0.0
    %583 = vmatpush1.msra.mxu0 0.0
    %584 = vmatprep.subr.mxu0 0.0
    %585 = vmatpush1.msra.mxu0 0.0
    %586 = vmatprep.subr.mxu0 0.0
    %587 = vmatpush1.msra.mxu0 0.0
    %588 = vmatprep.mubr.f32.mxu0 0.0
    %589 = vmatmul.mubr.f32.gmra.mrb[0].mxu0 %v513
    %v590 = vpop.f32.mrb[0].mxu0
    %v591 = vadd.f32 0.0, %v590
    %v592 = vpop.f32.mrb[0].mxu0
    %593 = vmatprep.mubr.f32.mxu0 0.0
    %594 = vmatmul.mubr.f32.gmra.mrb[0].mxu0 %v516
    %v595 = vpop.f32.mrb[0].mxu0
    %v596 = vadd.f32 0.0, %v595
    %v597 = vpop.f32.mrb[0].mxu0
    %598 = vmatprep.mubr.f32.mxu0 0.0
    %599 = vmatmul.mubr.f32.gmra.mrb[0].mxu0 %v519
    %v600 = vpop.f32.mrb[0].mxu0
    %v601 = vadd.f32 0.0, %v600
    %v602 = vpop.f32.mrb[0].mxu0
    %603 = vmatprep.mubr.f32.mxu0 0.0
    %604 = vmatmul.mubr.f32.gmra.mrb[0].mxu0 %v522
    %v605 = vpop.f32.mrb[0].mxu0
    %v606 = vadd.f32 0.0, %v605
    %v607 = vpop.f32.mrb[0].mxu0
    %608 = vdwg.mxu0
    %v609 = vmul.f32 %v591, 0.25
    %v610 = vmul.f32 %v596, 0.25
    %v611 = vmul.f32 %v601, 0.25
    %v612 = vmul.f32 %v606, 0.25
    %v613 = vmul.f32 %v609, %v609
    %v614 = vmul.f32 %v610, %v610
    %v615 = vsub.f32 %v611, %v613
    %v616 = vsub.f32 %v612, %v614
    %v617 = vmax.f32 %v615, 0.0
    %v618 = vmax.f32 %v616, 0.0
    %v619 = vadd.f32 %v617, 1e-05
    %v620 = vadd.f32 %v618, 1e-05
    %v621 = vrsqrt.pop %v619
    %v622 = vrsqrt.pop %v620
    %v623 = vmul.f32 %v609, %v621
    %v624 = vmul.f32 %v610, %v622
    %v626 = vsel %vm306, %v621, 0
    %v629 = vsel %vm306, %v622, 0
    %v632 = vsel %vm306, %v623, 0
    %v635 = vsel %vm306, %v624, 0
    %637 = vmatprep.subr.mxu0 0.0
    %638 = vmatpush1.msra.mxu0 %v509
    %639 = vmatprep.subr.mxu0 0.0
    %640 = vmatpush1.msra.mxu0 0.0
    %641 = vmatprep.subr.mxu0 0.0
    %642 = vmatpush1.msra.mxu0 0.0
    %643 = vmatprep.subr.mxu0 0.0
    %644 = vmatpush1.msra.mxu0 0.0
    %645 = vmatprep.subr.mxu0 0.0
    %646 = vmatpush1.msra.mxu0 0.0
    %647 = vmatprep.subr.mxu0 0.0
    %648 = vmatpush1.msra.mxu0 0.0
    %649 = vmatprep.subr.mxu0 0.0
    %650 = vmatpush1.msra.mxu0 0.0
    %651 = vmatprep.subr.mxu0 0.0
    %652 = vmatpush1.msra.mxu0 0.0
    %653 = vmatprep.subr.mxu0 0.0
    %654 = vmatpush1.msra.mxu0 0.0
    %655 = vmatprep.subr.mxu0 0.0
    %656 = vmatpush1.msra.mxu0 0.0
    %657 = vmatprep.subr.mxu0 0.0
    %658 = vmatpush1.msra.mxu0 0.0
    %659 = vmatprep.subr.mxu0 0.0
    %660 = vmatpush1.msra.mxu0 0.0
    %661 = vmatprep.subr.mxu0 0.0
    %662 = vmatpush1.msra.mxu0 0.0
    %663 = vmatprep.subr.mxu0 0.0
    %664 = vmatpush1.msra.mxu0 0.0
    %665 = vmatprep.subr.mxu0 0.0
    %666 = vmatpush1.msra.mxu0 0.0
    %667 = vmatprep.subr.mxu0 0.0
    %668 = vmatpush1.msra.mxu0 0.0
    %669 = vmatprep.subr.mxu0 0.0
    %670 = vmatpush1.msra.mxu0 0.0
    %671 = vmatprep.subr.mxu0 0.0
    %672 = vmatpush1.msra.mxu0 0.0
    %673 = vmatprep.subr.mxu0 0.0
    %674 = vmatpush1.msra.mxu0 0.0
    %675 = vmatprep.subr.mxu0 0.0
    %676 = vmatpush1.msra.mxu0 0.0
    %677 = vmatprep.subr.mxu0 0.0
    %678 = vmatpush1.msra.mxu0 0.0
    %679 = vmatprep.subr.mxu0 0.0
    %680 = vmatpush1.msra.mxu0 0.0
    %681 = vmatprep.subr.mxu0 0.0
    %682 = vmatpush1.msra.mxu0 0.0
    %683 = vmatprep.subr.mxu0 0.0
    %684 = vmatpush1.msra.mxu0 0.0
    %685 = vmatprep.subr.mxu0 0.0
    %686 = vmatpush1.msra.mxu0 0.0
    %687 = vmatprep.subr.mxu0 0.0
    %688 = vmatpush1.msra.mxu0 0.0
    %689 = vmatprep.subr.mxu0 0.0
    %690 = vmatpush1.msra.mxu0 0.0
    %691 = vmatprep.subr.mxu0 0.0
    %692 = vmatpush1.msra.mxu0 0.0
    %693 = vmatprep.subr.mxu0 0.0
    %694 = vmatpush1.msra.mxu0 0.0
    %695 = vmatprep.subr.mxu0 0.0
    %696 = vmatpush1.msra.mxu0 0.0
    %697 = vmatprep.subr.mxu0 0.0
    %698 = vmatpush1.msra.mxu0 0.0
    %699 = vmatprep.subr.mxu0 0.0
    %700 = vmatpush1.msra.mxu0 0.0
    %701 = vmatprep.mubr.f32.mxu0 0.0
    %702 = vmatmul.mubr.f32.gmra.mrb[0].mxu0 %v626
    %v703 = vpop.f32.mrb[0].mxu0
    %v704 = vadd.f32 0.0, %v703
    %v705 = vpop.f32.mrb[0].mxu0
    %706 = vmatprep.mubr.f32.mxu0 0.0
    %707 = vmatmul.mubr.f32.gmra.mrb[0].mxu0 %v629
    %v708 = vpop.f32.mrb[0].mxu0
    %v709 = vadd.f32 0.0, %v708
    %v710 = vpop.f32.mrb[0].mxu0
    %711 = vmatprep.mubr.f32.mxu0 0.0
    %712 = vmatmul.mubr.f32.gmra.mrb[0].mxu0 %v632
    %v713 = vpop.f32.mrb[0].mxu0
    %v714 = vadd.f32 0.0, %v713
    %v715 = vpop.f32.mrb[0].mxu0
    %716 = vmatprep.mubr.f32.mxu0 0.0
    %717 = vmatmul.mubr.f32.gmra.mrb[0].mxu0 %v635
    %v718 = vpop.f32.mrb[0].mxu0
    %v719 = vadd.f32 0.0, %v718
    %v720 = vpop.f32.mrb[0].mxu0
    %721 = vdwg.mxu0
    %v722 = vmul.f32 %v497, %v704
    %v723 = vmul.f32 %v502, %v709
    %v724 = vlaneseq
    %v725 = vshrl.u32 %v724, 7
    %v726 = vsub.s32 3, %v725
    %v727 = vrot.slane %v98, %v726
    %v728 = vsub.f32 %v727, %v714
    %v729 = vsub.f32 %v727, %v719
    %v730 = vadd.f32 %v722, %v728
    %v731 = vadd.f32 %v723, %v729
    %vm732 = vcmp.ge.f32.partialorder %v730, 0.0
    %vm733 = vcmp.ge.f32.partialorder %v731, 0.0
    %v734 = vmul.f32 %v730, 0.22916667
    %v735 = vmul.f32 %v731, 0.22916667
    %v736 = vsel %vm732, %v730, %v734
    %v737 = vsel %vm733, %v731, %v735
    %738 = vst.msk [vmem:[#allocation8] sm:$0xff] %vm192, %v736
    %739 = vst.msk [vmem:[#allocation8 + $0x8] sm:$0xff] %vm192, %v737
    // Predicated region
    $region30: #{tpu_custom_call.1} parent=1 // pred_check
      _
    $region31: #{tpu_custom_call.1} parent=1 // pred_check_branch
      %741 = sbr.rel (0) target = $region33
    $region32: #{tpu_custom_call.1} parent=1 // pred_region
      %s743 = ssub.s32 256, 256
      %744 = vsyncadd [#allocation4], %s743
      %s745 = sshll.u32 [#allocation8], 4
      %s746 = int_to_ptr.vmem [resolvable:$true] %s745
      %751 = dma.vmem_to_hbm [thread:$0]  %s746, 256, %s4, [#allocation4], 128, 128, 8
    $region33: #{tpu_custom_call.1} parent=1 // pred_fallthru
      _
    // Predicated region
    $region34: #{tpu_custom_call.1} parent=1 // pred_check
      _
    $region35: #{tpu_custom_call.1} parent=1 // pred_check_branch
      %753 = sbr.rel (0) target = $region37
    $region36: #{tpu_custom_call.1} parent=1 // pred_region
      %754 = dma.done [#allocation4], 256
    $region37: #{tpu_custom_call.1} parent=1 // pred_fallthru
      _
    %755 = vsyncpa [#allocation3], 1
    %756 = vsyncpa [#allocation6], 1
    %757 = vsyncpa [#allocation4], 1

</llo_original>
